<compile_context>
chip_gen: v5e
topology: v5e:2x2
jax: 0.10.0
libtpu: 0.0.40
codegen_flags: <defaults>
</compile_context>

<pallas_src>
import jax
import jax.numpy as jnp
from jax.experimental import pallas as pl
from jax.experimental.pallas import tpu as pltpu

_LANES = 128


def _make_kernel(tile, kk_per, d, needs_mask):
    def kernel(x_ref, t_ref, o_ref):
        # x_ref/t_ref: (tile, 128) block of one sample's features.
        # o_ref: (4, 128) lane-partials, resident across the reduction axis.
        #   row 0: sum BCE, row 1: sum(probs*t), row 2: sum(probs), row 3: sum(t)
        j = pl.program_id(2)

        @pl.when(j == 0)
        def _init():
            o_ref[...] = jnp.zeros_like(o_ref)

        x = x_ref[...].astype(jnp.float32)
        t = t_ref[...].astype(jnp.float32)

        # Two transcendentals per element (tanh + log), shared between the
        # stable BCE softplus term and the sigmoid:
        #   sigmoid(x)     = 0.5 * (1 + tanh(x/2))
        #   softplus(-|x|) = -log(0.5 * (1 + |tanh(x/2)|))
        th = jnp.tanh(0.5 * x)
        probs = 0.5 + 0.5 * th
        bce = jnp.maximum(x, 0.0) - x * t - jnp.log(0.5 * (1.0 + jnp.abs(th)))

        if needs_mask:
            # Zero out lane-tail padding and any rows of a partial block that
            # lie beyond the valid element count D (garbage reads are safe:
            # jnp.where is a select, NaN/Inf do not propagate).
            start = (pl.program_id(0) * kk_per + j) * (tile * _LANES)
            rows = jax.lax.broadcasted_iota(jnp.int32, (tile, _LANES), 0)
            lanes = jax.lax.broadcasted_iota(jnp.int32, (tile, _LANES), 1)
            valid = (start + rows * _LANES + lanes) < d
            bce = jnp.where(valid, bce, 0.0)
            probs = jnp.where(valid, probs, 0.0)
            t = jnp.where(valid, t, 0.0)

        # One fused (4,128) RMW per step instead of four 1-sublane RMWs.
        parts = jnp.concatenate(
            [
                jnp.sum(bce, axis=0, keepdims=True),
                jnp.sum(probs * t, axis=0, keepdims=True),
                jnp.sum(probs, axis=0, keepdims=True),
                jnp.sum(t, axis=0, keepdims=True),
            ],
            axis=0,
        )
        o_ref[...] += parts

    return kernel


def _sublane_pack(dtype):
    # Packed-sublane multiple: 8 for 32-bit, 16 for 16-bit, 32 for 8-bit.
    return max(8, 32 // max(1, jnp.dtype(dtype).itemsize))


def pallas_loss(logits, targets, *, tile_r=None):
    """logits, targets: same-shape N-leading arrays. Returns the scalar loss."""
    n = logits.shape[0]
    d = 1
    for s in logits.shape[1:]:
        d *= s

    # Keep native dtypes in HBM; the kernel casts to f32 per-block.
    x = logits.reshape(n, d)
    t = targets.reshape(n, d)

    r = pl.cdiv(d, _LANES)
    if r * _LANES != d:
        # Lane-tail only (< 128 elems/sample); values are irrelevant because
        # the kernel masks by element index.
        x = jnp.pad(x, ((0, 0), (0, r * _LANES - d)))
        t = jnp.pad(t, ((0, 0), (0, r * _LANES - d)))
    x3 = x.reshape(n, r, _LANES)
    t3 = t.reshape(n, r, _LANES)

    pack = max(_sublane_pack(logits.dtype), _sublane_pack(targets.dtype))
    if tile_r is None:
        min_itemsize = min(
            jnp.dtype(logits.dtype).itemsize, jnp.dtype(targets.dtype).itemsize
        )
        tile_r = 8192 // max(1, min_itemsize)  # ~1 MiB / input block for f32
    tile = max(1, min(int(tile_r), r))
    tile = ((tile + pack - 1) // pack) * pack  # keep blocks (8/16/32, 128)-legal

    kk = pl.cdiv(r, tile)
    # v7x 2-TC load balance: for odd (incl. 1) batch sizes, split the K
    # reduction in two parallel halves and sum the halves in the epilogue.
    split = 2 if (n % 2 == 1 and kk >= 2) else 1
    kk_per = pl.cdiv(kk, split)

    covered = split * kk_per * tile * _LANES
    needs_mask = covered != d

    if split * kk_per > kk:
        # Last block of the second half would be fully out of range; clamp the
        # DMA to the last valid block (its contribution is zeroed by the mask,
        # which uses the *unclamped* element index).
        def in_map(s, i, j):
            return (i, jnp.minimum(s * kk_per + j, kk - 1), 0)
    else:
        def in_map(s, i, j):
            return (i, s * kk_per + j, 0)

    kernel = _make_kernel(tile, kk_per, d, needs_mask)

    cost = pl.CostEstimate(
        flops=10 * n * r * _LANES,
        transcendentals=2 * n * r * _LANES,
        bytes_accessed=int(x3.size) * x3.dtype.itemsize
        + int(t3.size) * t3.dtype.itemsize
        + split * n * 4 * _LANES * 4,
    )

    partials = pl.pallas_call(
        kernel,
        out_shape=jax.ShapeDtypeStruct((split, n, 4, _LANES), jnp.float32),
        grid=(split, n, kk_per),
        in_specs=[
            pl.BlockSpec((None, tile, _LANES), in_map),
            pl.BlockSpec((None, tile, _LANES), in_map),
        ],
        out_specs=pl.BlockSpec((None, None, 4, _LANES), lambda s, i, j: (s, i, 0, 0)),
        compiler_params=pltpu.CompilerParams(
            dimension_semantics=("parallel", "parallel", "arbitrary"),
            vmem_limit_bytes=32 * 1024 * 1024,
        ),
        cost_estimate=cost,
    )(x3, t3)

    # Tiny epilogue on the (split, N, 4, 128) partial sums.
    sums = jnp.sum(partials, axis=(0, 3))  # (N, 4)
    bce_sum = jnp.sum(sums[:, 0])
    inter, m1, m2 = sums[:, 1], sums[:, 2], sums[:, 3]
    smooth = 1.0
    loss1 = bce_sum / (n * d)  # mean over the ORIGINAL element count
    score = 2.0 * (inter + smooth) / (m1 + m2 + smooth)
    loss2 = 1.0 - jnp.sum(score) / n
    return loss1 + loss2


def _reference_loss(logits, targets):
    """Pure-JAX reference mirroring the PyTorch forward exactly."""
    n = logits.shape[0]
    x = logits.reshape(-1).astype(jnp.float32)
    t = targets.reshape(-1).astype(jnp.float32)
    bce = jnp.mean(jnp.maximum(x, 0.0) - x * t + jnp.log1p(jnp.exp(-jnp.abs(x))))
    probs = jax.nn.sigmoid(logits.reshape(n, -1).astype(jnp.float32))
    m2 = targets.reshape(n, -1).astype(jnp.float32)
    smooth = 1.0
    score = 2.0 * (jnp.sum(probs * m2, 1) + smooth) / (
        jnp.sum(probs, 1) + jnp.sum(m2, 1) + smooth
    )
    return (1.0 - jnp.sum(score) / n) + bce


if __name__ == "__main__":
    key = jax.random.PRNGKey(0)
    k1, k2 = jax.random.split(key)
    # Small NCHW shapes, consistent with a segmentation-style loss.
    shape = (2, 4, 16, 16)
    logits = jax.random.normal(k1, shape, dtype=jnp.float32)
    targets = (jax.random.uniform(k2, shape) > 0.5).astype(jnp.float32)

    loss = pallas_loss(logits, targets)
    loss = jax.block_until_ready(loss)

    ref = _reference_loss(logits, targets)
    assert jnp.allclose(loss, ref, rtol=1e-5, atol=1e-5), (loss, ref)

    print("KERNEL_OK")
</pallas_src>

<mosaic_0001>
module attributes {stable_mosaic.version = 11 : i64} {
  func.func @kernel(%arg0: i32, %arg1: i32, %arg2: i32, %arg3: memref<1x8x128xf32, #tpu.memory_space<vmem>>, %arg4: memref<1x8x128xf32, #tpu.memory_space<vmem>>, %arg5: memref<1x1x4x128xf32, #tpu.memory_space<vmem>>) attributes {dimension_semantics = [#tpu.dimension_semantics<parallel>, #tpu.dimension_semantics<parallel>, #tpu.dimension_semantics<arbitrary>], iteration_bounds = array<i64: 1, 2, 1>, scalar_prefetch = 0 : i64, scratch_operands = 0 : i64, tpu.core_type = #tpu.core_type<tc>, window_params = [{transform_indices = @transform_0, window_bounds = array<i64: 1, 8, 128>}, {transform_indices = @transform_1, window_bounds = array<i64: 1, 8, 128>}, {transform_indices = @transform_2, window_bounds = array<i64: 1, 1, 4, 128>}]} {
    %c0_i32 = arith.constant 0 : i32
    %0 = arith.cmpi eq, %arg2, %c0_i32 : i32
    %1 = arith.extui %0 : i1 to i32
    %c0_i32_0 = arith.constant 0 : i32
    %2 = arith.cmpi ne, %1, %c0_i32_0 : i32
    scf.if %2 {
      %cst_23 = arith.constant 0.000000e+00 : f32
      %41 = vector.broadcast %cst_23 : f32 to vector<4x128xf32>
      %c0_24 = arith.constant 0 : index
      %c0_25 = arith.constant 0 : index
      %c0_26 = arith.constant 0 : index
      %c0_27 = arith.constant 0 : index
      %42 = vector.load %arg5[%c0_24, %c0_25, %c0_26, %c0_27] : memref<1x1x4x128xf32, #tpu.memory_space<vmem>>, vector<1x1x4x128xf32>
      %43 = vector.shape_cast %42 : vector<1x1x4x128xf32> to vector<4x128xf32>
      %44 = vector.shape_cast %41 : vector<4x128xf32> to vector<1x1x4x128xf32>
      tpu.vector_store %arg5[%c0_24, %c0_25, %c0_26, %c0_27], %44 {strides = array<i32>} : memref<1x1x4x128xf32, #tpu.memory_space<vmem>>, vector<1x1x4x128xf32>,
    } else {
    }
    %c0 = arith.constant 0 : index
    %c0_1 = arith.constant 0 : index
    %c0_2 = arith.constant 0 : index
    %3 = vector.load %arg3[%c0, %c0_1, %c0_2] : memref<1x8x128xf32, #tpu.memory_space<vmem>>, vector<1x8x128xf32>
    %4 = vector.shape_cast %3 : vector<1x8x128xf32> to vector<8x128xf32>
    %c0_3 = arith.constant 0 : index
    %c0_4 = arith.constant 0 : index
    %c0_5 = arith.constant 0 : index
    %5 = vector.load %arg4[%c0_3, %c0_4, %c0_5] : memref<1x8x128xf32, #tpu.memory_space<vmem>>, vector<1x8x128xf32>
    %6 = vector.shape_cast %5 : vector<1x8x128xf32> to vector<8x128xf32>
    %cst = arith.constant 5.000000e-01 : f32
    %7 = vector.broadcast %cst : f32 to vector<8x128xf32>
    %8 = arith.mulf %7, %4 : vector<8x128xf32>
    %9 = math.tanh %8 : vector<8x128xf32>
    %cst_6 = arith.constant 5.000000e-01 : f32
    %10 = vector.broadcast %cst_6 : f32 to vector<8x128xf32>
    %11 = arith.mulf %10, %9 : vector<8x128xf32>
    %cst_7 = arith.constant 5.000000e-01 : f32
    %12 = vector.broadcast %cst_7 : f32 to vector<8x128xf32>
    %13 = arith.addf %12, %11 : vector<8x128xf32>
    %cst_8 = arith.constant 0.000000e+00 : f32
    %14 = vector.broadcast %cst_8 : f32 to vector<8x128xf32>
    %15 = arith.maximumf %4, %14 : vector<8x128xf32>
    %16 = arith.mulf %4, %6 : vector<8x128xf32>
    %17 = arith.subf %15, %16 : vector<8x128xf32>
    %18 = math.absf %9 : vector<8x128xf32>
    %cst_9 = arith.constant 1.000000e+00 : f32
    %19 = vector.broadcast %cst_9 : f32 to vector<8x128xf32>
    %20 = arith.addf %19, %18 : vector<8x128xf32>
    %cst_10 = arith.constant 5.000000e-01 : f32
    %21 = vector.broadcast %cst_10 : f32 to vector<8x128xf32>
    %22 = arith.mulf %21, %20 : vector<8x128xf32>
    %23 = math.log %22 : vector<8x128xf32>
    %24 = arith.subf %17, %23 : vector<8x128xf32>
    %cst_11 = arith.constant dense<0.000000e+00> : vector<128xf32>
    %25 = vector.multi_reduction <add>, %24, %cst_11 [0] : vector<8x128xf32> to vector<128xf32>
    %26 = vector.shape_cast %25 : vector<128xf32> to vector<1x128xf32>
    %27 = arith.mulf %13, %6 : vector<8x128xf32>
    %cst_12 = arith.constant dense<0.000000e+00> : vector<128xf32>
    %28 = vector.multi_reduction <add>, %27, %cst_12 [0] : vector<8x128xf32> to vector<128xf32>
    %29 = vector.shape_cast %28 : vector<128xf32> to vector<1x128xf32>
    %cst_13 = arith.constant dense<0.000000e+00> : vector<128xf32>
    %30 = vector.multi_reduction <add>, %13, %cst_13 [0] : vector<8x128xf32> to vector<128xf32>
    %31 = vector.shape_cast %30 : vector<128xf32> to vector<1x128xf32>
    %cst_14 = arith.constant dense<0.000000e+00> : vector<128xf32>
    %32 = vector.multi_reduction <add>, %6, %cst_14 [0] : vector<8x128xf32> to vector<128xf32>
    %33 = vector.shape_cast %32 : vector<128xf32> to vector<1x128xf32>
    %34 = tpu.concatenate %26, %29, %31, %33 in 0 : vector<1x128xf32>, vector<1x128xf32>, vector<1x128xf32>, vector<1x128xf32> -> vector<4x128xf32>
    %c0_15 = arith.constant 0 : index
    %c0_16 = arith.constant 0 : index
    %c0_17 = arith.constant 0 : index
    %c0_18 = arith.constant 0 : index
    %35 = vector.load %arg5[%c0_15, %c0_16, %c0_17, %c0_18] : memref<1x1x4x128xf32, #tpu.memory_space<vmem>>, vector<1x1x4x128xf32>
    %36 = vector.shape_cast %35 : vector<1x1x4x128xf32> to vector<4x128xf32>
    %37 = arith.addf %36, %34 : vector<4x128xf32>
    %c0_19 = arith.constant 0 : index
    %c0_20 = arith.constant 0 : index
    %c0_21 = arith.constant 0 : index
    %c0_22 = arith.constant 0 : index
    %38 = vector.load %arg5[%c0_19, %c0_20, %c0_21, %c0_22] : memref<1x1x4x128xf32, #tpu.memory_space<vmem>>, vector<1x1x4x128xf32>
    %39 = vector.shape_cast %38 : vector<1x1x4x128xf32> to vector<4x128xf32>
    %40 = vector.shape_cast %37 : vector<4x128xf32> to vector<1x1x4x128xf32>
    tpu.vector_store %arg5[%c0_19, %c0_20, %c0_21, %c0_22], %40 {strides = array<i32>} : memref<1x1x4x128xf32, #tpu.memory_space<vmem>>, vector<1x1x4x128xf32>,
    return
  }
  func.func @transform_0(%arg0: i32, %arg1: i32, %arg2: i32) -> (i32, i32, i32) {
    %c1_i32 = arith.constant 1 : i32
    %0 = arith.muli %arg0, %c1_i32 : i32
    %1 = arith.addi %0, %arg2 : i32
    %c0_i32 = arith.constant 0 : i32
    %c0_i32_0 = arith.constant 0 : i32
    return %arg1, %1, %c0_i32 : i32, i32, i32
  }
  func.func @transform_1(%arg0: i32, %arg1: i32, %arg2: i32) -> (i32, i32, i32) {
    %c1_i32 = arith.constant 1 : i32
    %0 = arith.muli %arg0, %c1_i32 : i32
    %1 = arith.addi %0, %arg2 : i32
    %c0_i32 = arith.constant 0 : i32
    %c0_i32_0 = arith.constant 0 : i32
    return %arg1, %1, %c0_i32 : i32, i32, i32
  }
  func.func @transform_2(%arg0: i32, %arg1: i32, %arg2: i32) -> (i32, i32, i32, i32) {
    %c0_i32 = arith.constant 0 : i32
    %c0_i32_0 = arith.constant 0 : i32
    %c0_i32_1 = arith.constant 0 : i32
    return %arg0, %arg1, %c0_i32, %c0_i32_0 : i32, i32, i32, i32
  }
}

</mosaic_0001>

<llo_original>
// kernel: tpu_custom_call.1
$region0: #{tpu_custom_call.1}
  #allocation0 [shape = 'u32[]', space=smem, size = 0x4, offset = 0x4, fixed_abs, tag = 'smem constant byte address 0x4 - core index']
  #allocation1 [shape = 'u32[72,128]{1,0:T(1,128)}', space=vmem, size = 0x9000, scoped, tag = 'internal scratch']
  %s0 = inlined_call_operand.hbm [shape: f32[2,8,128], index: 0, kind: input, shape index: {}]
  %s1 = inlined_call_operand.hbm [shape: f32[2,8,128], index: 1, kind: input, shape index: {}]
  %s2 = inlined_call_operand.hbm [shape: f32[1,2,4,128], index: 2, kind: output, shape index: {}]
  %s3 = sld [smem:[#allocation0]]
  $region53: #{tpu_custom_call.1} parent=0
    _
  %s5 = ssub.s32 1, %s3
  %s6 = scalar_select 0, %s5, %s3
  $region1: #{tpu_custom_call.1} parent=0
    #allocation2 [shape = 'u8[8192]{0}', space=vmem, size = 0x2000, scoped, tag = 'input window, operand 0']
    #allocation3 [shape = 's32[2]{0}', space=sflag, size = 0x8, scoped, tag = 'scoped memory for tpu_custom_call.1']
    #allocation4 [shape = 's32[2]{0}', space=sflag, size = 0x8, scoped, tag = 'scoped memory for tpu_custom_call.1']
    #allocation5 [shape = 'u8[8192]{0}', space=vmem, size = 0x2000, scoped, tag = 'input window, operand 1']
    #allocation6 [shape = 's32[2]{0}', space=sflag, size = 0x8, scoped, tag = 'scoped memory for tpu_custom_call.1']
    #allocation7 [shape = 'u8[4096]{0}', space=vmem, size = 0x1000, scoped, tag = 'output window, operand 0']
    %7 = vsyncpa [#allocation3], 0
    %s8 = scalar_lea.sflag [#allocation3], 1
    %9 = vsyncpa %s8, 0
    %10 = vsyncpa [#allocation6], 0
    %s11 = scalar_lea.sflag [#allocation6], 1
    %12 = vsyncpa %s11, 0
    %13 = vsyncpa [#allocation4], 0
    %s14 = scalar_lea.sflag [#allocation4], 1
    %15 = vsyncpa %s14, 0
    loop: start=0, step=1, limit=4
    $region2: #{tpu_custom_call.1} parent=1 // loop_pre_header
      _
    $region3: #{tpu_custom_call.1} parent=1 // loop_header
      %s17 = sphi 0, %s21
      %p18 = scmp.ge.s32.totalorder %s17, 4
      %s24 = sphi 0, %s43
      %s25 = sphi 0, %s39
      %s26 = sphi 0, %s35
      %s27 = sphi 0, %s24
      %s28 = sphi 0, %s25
      %s29 = sphi 0, %s26
      %s30 = sphi 0, %s27
      %s31 = sphi 0, %s28
      %s32 = sphi 0, %s29
      %s50 = sphi 0, %s52
      %s53 = sphi 0, %s50
      %s54 = sphi 0, %s53
      %s70 = sphi 0, %s54
      %s80 = sphi 0, %s82
      %s83 = sphi 0, %s80
      %s84 = sphi 0, %s83
      %s100 = sphi 0, %s84
      %s108 = sphi 0, %s110
      %s111 = sphi 0, %s108
      %s112 = sphi 0, %s111
      %s128 = sphi 0, %s112
    $region4: #{tpu_custom_call.1} parent=1 // loop_header_branch
      %20 = sbr.rel (%p18) target = $region8
    $region5: #{tpu_custom_call.1} parent=1 // loop_body
      %s22 = ssub.s32 %s17, 1
      %s23 = ssub.s32 %s17, 2
      %s33 = sadd.s32 1, %s26
      %p34 = scmp.ge.s32.totalorder %s33, 1
      %s35 = scalar_select %p34, 0, %s33
      %s36 = sadd.s32 1, %s25
      %s37 = scalar_select %p34, %s36, %s25
      %p38 = scmp.ge.s32.totalorder %s37, 2
      %s39 = scalar_select %p38, 0, %s37
      %s40 = sadd.s32 1, %s24
      %s41 = scalar_select %p38, %s40, %s24
      %p42 = scmp.ge.s32.totalorder %s41, 1
      %s43 = scalar_select %p42, 0, %s41
      %s44 = sadd.s32 %s24, %s26
      %s45 = sadd.s32 %s43, %s35
      %s46 = ssub.s32 %s25, %s39
      %s47 = ssub.s32 %s44, %s45
      %s48 = sor.u32 %s46, %s47
      %p49 = scmp.eq.s32.totalorder %s48, 0
      %s51 = sadd.s32 %s50, 1
      %s52 = scalar_select %p49, %s50, %s51
      %p55 = pneg %p49
      %p56 = scmp.eq.s32.totalorder %s17, 1
      %p57 = por %p55, %p56
      %p58 = scmp.ne.s32.totalorder %s50, %s53
      %p59 = scmp.eq.s32.totalorder %s17, 0
      %p60 = por %p58, %p59
      %p61 = scmp.ne.s32.totalorder %s50, %s53
      %p62 = scmp.eq.s32.totalorder %s22, 1
      %p63 = por %p61, %p62
      %p64 = scmp.ne.s32.totalorder %s53, %s54
      %p65 = scmp.eq.s32.totalorder %s22, 0
      %p66 = por %p64, %p65
      %p67 = scmp.ne.s32.totalorder %s53, %s54
      %p68 = scmp.eq.s32.totalorder %s23, 1
      %p69 = por %p67, %p68
      %p71 = scmp.ne.s32.totalorder %s54, %s70
      %p72 = scmp.eq.s32.totalorder %s23, 0
      %p73 = por %p71, %p72
      %s74 = sadd.s32 %s24, %s26
      %s75 = sadd.s32 %s43, %s35
      %s76 = ssub.s32 %s25, %s39
      %s77 = ssub.s32 %s74, %s75
      %s78 = sor.u32 %s76, %s77
      %p79 = scmp.eq.s32.totalorder %s78, 0
      %s81 = sadd.s32 %s80, 1
      %s82 = scalar_select %p79, %s80, %s81
      %p85 = pneg %p79
      %p86 = scmp.eq.s32.totalorder %s17, 1
      %p87 = por %p85, %p86
      %p88 = scmp.ne.s32.totalorder %s80, %s83
      %p89 = scmp.eq.s32.totalorder %s17, 0
      %p90 = por %p88, %p89
      %p91 = scmp.ne.s32.totalorder %s80, %s83
      %p92 = scmp.eq.s32.totalorder %s22, 1
      %p93 = por %p91, %p92
      %p94 = scmp.ne.s32.totalorder %s83, %s84
      %p95 = scmp.eq.s32.totalorder %s22, 0
      %p96 = por %p94, %p95
      %p97 = scmp.ne.s32.totalorder %s83, %s84
      %p98 = scmp.eq.s32.totalorder %s23, 1
      %p99 = por %p97, %p98
      %p101 = scmp.ne.s32.totalorder %s84, %s100
      %p102 = scmp.eq.s32.totalorder %s23, 0
      %p103 = por %p101, %p102
      %s104 = ssub.s32 %s24, %s43
      %s105 = ssub.s32 %s25, %s39
      %s106 = sor.u32 %s104, %s105
      %p107 = scmp.eq.s32.totalorder %s106, 0
      %s109 = sadd.s32 %s108, 1
      %s110 = scalar_select %p107, %s108, %s109
      %p113 = pneg %p107
      %p114 = scmp.eq.s32.totalorder %s17, 1
      %p115 = por %p113, %p114
      %p116 = scmp.ne.s32.totalorder %s108, %s111
      %p117 = scmp.eq.s32.totalorder %s17, 0
      %p118 = por %p116, %p117
      %p119 = scmp.ne.s32.totalorder %s108, %s111
      %p120 = scmp.eq.s32.totalorder %s22, 1
      %p121 = por %p119, %p120
      %p122 = scmp.ne.s32.totalorder %s111, %s112
      %p123 = scmp.eq.s32.totalorder %s22, 0
      %p124 = por %p122, %p123
      %p125 = scmp.ne.s32.totalorder %s111, %s112
      %p126 = scmp.eq.s32.totalorder %s23, 1
      %p127 = por %p125, %p126
      %p129 = scmp.ne.s32.totalorder %s112, %s128
      %p130 = scmp.eq.s32.totalorder %s23, 0
      %p131 = por %p129, %p130
      %p132 = scmp.le.s32.totalorder 1, %s17
      %p133 = scmp.lt.s32.totalorder %s17, 3
      %p134 = pnand %p132, %p133
      %p135 = pneg %p134
      // Predicated region
      $region9: #{tpu_custom_call.1} parent=5 // pred_check
        _
      $region10: #{tpu_custom_call.1} parent=5 // pred_check_branch
        %137 = sbr.rel (%p134) target = $region12
      $region11: #{tpu_custom_call.1} parent=5 // pred_region
        %s138 = ssub.s32 %s17, 1
      $region12: #{tpu_custom_call.1} parent=5 // pred_fallthru
        _
      %p139 = scmp.lt.s32.totalorder %s17, 2
      // Predicated region
      $region13: #{tpu_custom_call.1} parent=5 // pred_check
        %p140 = pneg %p139
      $region14: #{tpu_custom_call.1} parent=5 // pred_check_branch
        %142 = sbr.rel (%p140) target = $region16
      $region15: #{tpu_custom_call.1} parent=5 // pred_region
        // Predicated region
        $region17: #{tpu_custom_call.1} parent=15 // pred_check
          %p143 = pneg %p60
        $region18: #{tpu_custom_call.1} parent=15 // pred_check_branch
          %145 = sbr.rel (%p143) target = $region20
        $region19: #{tpu_custom_call.1} parent=15 // pred_region
          %s146 = sand.u32 %s50, 1
          %s147 = scalar_lea.sflag [#allocation3], %s146
          %s148 = sand.u32 %s50, 1
          %s149 = smul.addr %s148, 8
          %s150 = scalar_lea.vmem [#allocation2], %s149
          %s151 = sadd.s32 %s24, %s26
          %153 = vsyncadd %s147, 0
          %s154 = sadd.s32 %s151, %s25
          %s155 = smul.addr %s154, 8
          %s156 = scalar_lea.hbm %s0, %s155
          %s158 = sshll.u32 %s156, 4
          %s159 = int_to_ptr.hbm [resolvable:$true] %s158
          %s160 = sshll.u32 %s150, 4
          %s161 = int_to_ptr.vmem [resolvable:$true] %s160
          %163 = dma.hbm_to_vmem [thread:$0]  %s159, 128, %s161, %s147
        $region20: #{tpu_custom_call.1} parent=15 // pred_fallthru
          _
        // Predicated region
        $region21: #{tpu_custom_call.1} parent=15 // pred_check
          %p164 = pneg %p90
        $region22: #{tpu_custom_call.1} parent=15 // pred_check_branch
          %166 = sbr.rel (%p164) target = $region24
        $region23: #{tpu_custom_call.1} parent=15 // pred_region
          %s167 = sand.u32 %s80, 1
          %s168 = scalar_lea.sflag [#allocation6], %s167
          %s169 = sand.u32 %s80, 1
          %s170 = smul.addr %s169, 8
          %s171 = scalar_lea.vmem [#allocation5], %s170
          %s172 = sadd.s32 %s24, %s26
          %174 = vsyncadd %s168, 0
          %s175 = sadd.s32 %s172, %s25
          %s176 = smul.addr %s175, 8
          %s177 = scalar_lea.hbm %s1, %s176
          %s179 = sshll.u32 %s177, 4
          %s180 = int_to_ptr.hbm [resolvable:$true] %s179
          %s181 = sshll.u32 %s171, 4
          %s182 = int_to_ptr.vmem [resolvable:$true] %s181
          %184 = dma.hbm_to_vmem [thread:$0]  %s180, 128, %s182, %s168
        $region24: #{tpu_custom_call.1} parent=15 // pred_fallthru
          _
      $region16: #{tpu_custom_call.1} parent=5 // pred_fallthru
        _
      %p185 = scmp.le.s32.totalorder 1, %s17
      %p186 = scmp.lt.s32.totalorder %s17, 3
      %p187 = pnand %p185, %p186
      %p188 = pneg %p187
      // Predicated region
      $region25: #{tpu_custom_call.1} parent=5 // pred_check
        _
      $region26: #{tpu_custom_call.1} parent=5 // pred_check_branch
        %190 = sbr.rel (%p187) target = $region28
      $region27: #{tpu_custom_call.1} parent=5 // pred_region
        %s191 = ssub.s32 %s17, 1
        %s192 = sand.u32 %s53, 1
        %s193 = scalar_lea.sflag [#allocation3], %s192
        %s194 = sand.u32 %s53, 1
        %s195 = smul.addr %s194, 8
        %s196 = scalar_lea.vmem [#allocation2], %s195
        // Predicated region
        $region29: #{tpu_custom_call.1} parent=27 // pred_check
          %p197 = pneg %p66
        $region30: #{tpu_custom_call.1} parent=27 // pred_check_branch
          %199 = sbr.rel (%p197) target = $region32
        $region31: #{tpu_custom_call.1} parent=27 // pred_region
          %201 = dma.done %s193, 128
        $region32: #{tpu_custom_call.1} parent=27 // pred_fallthru
          _
        %s202 = sand.u32 %s83, 1
        %s203 = scalar_lea.sflag [#allocation6], %s202
        %s204 = sand.u32 %s83, 1
        %s205 = smul.addr %s204, 8
        %s206 = scalar_lea.vmem [#allocation5], %s205
        // Predicated region
        $region33: #{tpu_custom_call.1} parent=27 // pred_check
          %p207 = pneg %p96
        $region34: #{tpu_custom_call.1} parent=27 // pred_check_branch
          %209 = sbr.rel (%p207) target = $region36
        $region35: #{tpu_custom_call.1} parent=27 // pred_region
          %211 = dma.done %s203, 128
        $region36: #{tpu_custom_call.1} parent=27 // pred_fallthru
          _
        %s212 = sand.u32 %s53, 1
        %s213 = scalar_lea.sflag [#allocation3], %s212
        %s214 = sand.u32 %s53, 1
        %s215 = smul.addr %s214, 8
        %s216 = scalar_lea.vmem [#allocation2], %s215
        %p217 = pneg %p66
        %p218 = pneg %p63
        %s219 = sand.u32 %s83, 1
        %s220 = scalar_lea.sflag [#allocation6], %s219
        %s221 = sand.u32 %s83, 1
        %s222 = smul.addr %s221, 8
        %s223 = scalar_lea.vmem [#allocation5], %s222
        %p224 = pneg %p96
        %p225 = pneg %p93
        %p226 = pneg %p124
        %p227 = pneg %p121
        %s228 = sand.u32 %s111, 1
        %s229 = scalar_lea.sflag [#allocation4], %s228
        %s230 = sand.u32 %s111, 1
        %s231 = smul.addr %s230, 4
        %s232 = scalar_lea.vmem [#allocation7], %s231
        %s233 = sadd.s32 %s27, %s29
        %s234 = sadd.s32 %s27, %s29
        %p235 = scmp.eq.s32.totalorder %s29, 0
        // Predicated region
        $region37: #{tpu_custom_call.1} parent=27 // pred_check
          %p236 = pneg %p235
        $region38: #{tpu_custom_call.1} parent=27 // pred_check_branch
          %238 = sbr.rel (%p236) target = $region40
        $region39: #{tpu_custom_call.1} parent=27 // pred_region
          %239 = vst [vmem:[%s232] sm:$0xf] 0.0
        $region40: #{tpu_custom_call.1} parent=27 // pred_fallthru
          _
        %v240 = vld [vmem:[%s196] sm:$0xff]
        %v241 = vld [vmem:[%s206] sm:$0xff]
        %v242 = vmul.f32 %v240, 0.5
        %v243 = vtanh.pop %v242
        %v244 = vmul.f32 %v243, 0.5
        %v245 = vadd.f32 %v244, 0.5
        %v246 = vmax.f32 %v240, 0.0
        %v247 = vmul.f32 %v240, %v241
        %v248 = vsub.f32 %v246, %v247
        %v249 = vand.u32 2147483647, %v243
        %v250 = vadd.f32 %v249, 1.0
        %v251 = vmul.f32 %v250, 0.5
        %v252 = vlog2.pop %v251
        %v253 = vmul.f32 %v252, 0.6931472
        %v254 = vsub.f32 %v248, %v253
        %v255 = vrot.slane %v254, 4
        %v256 = vadd.f32 %v254, %v255
        %v257 = vrot.slane %v256, 2
        %v258 = vadd.f32 %v256, %v257
        %v259 = vrot.slane %v258, 1
        %v260 = vadd.f32 %v258, %v259
        %v261 = vmul.f32 %v245, %v241
        %v262 = vrot.slane %v261, 4
        %v263 = vadd.f32 %v261, %v262
        %v264 = vrot.slane %v263, 2
        %v265 = vadd.f32 %v263, %v264
        %v266 = vrot.slane %v265, 1
        %v267 = vadd.f32 %v265, %v266
        %v268 = vrot.slane %v245, 4
        %v269 = vadd.f32 %v245, %v268
        %v270 = vrot.slane %v269, 2
        %v271 = vadd.f32 %v269, %v270
        %v272 = vrot.slane %v271, 1
        %v273 = vadd.f32 %v271, %v272
        %v274 = vrot.slane %v241, 4
        %v275 = vadd.f32 %v241, %v274
        %v276 = vrot.slane %v275, 2
        %v277 = vadd.f32 %v275, %v276
        %v278 = vrot.slane %v277, 1
        %v279 = vadd.f32 %v277, %v278
        %vm280 = vcmask 1040384
        %v281 = vsel %vm280, %v260, %v267
        %vm282 = vcmask 1041408
        %v283 = vsel %vm282, %v281, %v273
        %vm284 = vcmask 1042432
        %v285 = vsel %vm284, %v283, %v279
        %v286 = vld [vmem:[%s232] sm:$0xf]
        %v287 = vadd.f32 %v286, %v285
        %288 = vst [vmem:[%s232] sm:$0xf] %v287
        %s289 = sand.u32 %s111, 1
        %s290 = scalar_lea.sflag [#allocation4], %s289
        %s291 = sand.u32 %s111, 1
        %s292 = smul.addr %s291, 4
        %s293 = scalar_lea.vmem [#allocation7], %s292
        // Predicated region
        $region41: #{tpu_custom_call.1} parent=27 // pred_check
          %p294 = pneg %p121
        $region42: #{tpu_custom_call.1} parent=27 // pred_check_branch
          %296 = sbr.rel (%p294) target = $region44
        $region43: #{tpu_custom_call.1} parent=27 // pred_region
          %298 = vsyncadd %s290, 0
          %s299 = smul.addr %s27, 2
          %s300 = sadd.s32 %s28, %s299
          %s301 = smul.addr %s300, 4
          %s302 = scalar_lea.hbm %s2, %s301
          %s304 = sshll.u32 %s293, 4
          %s305 = int_to_ptr.vmem [resolvable:$true] %s304
          %s306 = sshll.u32 %s302, 4
          %s307 = int_to_ptr.hbm [resolvable:$true] %s306
          %309 = dma.vmem_to_hbm [thread:$0]  %s305, 64, %s307, %s290
        $region44: #{tpu_custom_call.1} parent=27 // pred_fallthru
          _
      $region28: #{tpu_custom_call.1} parent=5 // pred_fallthru
        _
      %p310 = scmp.le.s32.totalorder 2, %s17
      // Predicated region
      $region45: #{tpu_custom_call.1} parent=5 // pred_check
        %p311 = pneg %p310
      $region46: #{tpu_custom_call.1} parent=5 // pred_check_branch
        %313 = sbr.rel (%p311) target = $region48
      $region47: #{tpu_custom_call.1} parent=5 // pred_region
        %s314 = ssub.s32 %s17, 2
        // Predicated region
        $region49: #{tpu_custom_call.1} parent=47 // pred_check
          %p315 = pneg %p127
        $region50: #{tpu_custom_call.1} parent=47 // pred_check_branch
          %317 = sbr.rel (%p315) target = $region52
        $region51: #{tpu_custom_call.1} parent=47 // pred_region
          %s318 = sand.u32 %s112, 1
          %s319 = scalar_lea.sflag [#allocation4], %s318
          %s320 = sand.u32 %s112, 1
          %s321 = smul.addr %s320, 4
          %s322 = scalar_lea.vmem [#allocation7], %s321
          %324 = dma.done %s319, 64
        $region52: #{tpu_custom_call.1} parent=47 // pred_fallthru
          _
      $region48: #{tpu_custom_call.1} parent=5 // pred_fallthru
        _
    $region6: #{tpu_custom_call.1} parent=1 // loop_footer
      %s21 = sadd.s32 1, %s17
    $region7: #{tpu_custom_call.1} parent=1 // loop_footer_branch
      %16 = sbr.rel target = $region3
    $region8: #{tpu_custom_call.1} parent=1 // loop_exit
      _
    %325 = vsyncpa [#allocation3], 1
    %s326 = scalar_lea.sflag [#allocation3], 1
    %327 = vsyncpa %s326, 1
    %328 = vsyncpa [#allocation6], 1
    %s329 = scalar_lea.sflag [#allocation6], 1
    %330 = vsyncpa %s329, 1
    %331 = vsyncpa [#allocation4], 1
    %s332 = scalar_lea.sflag [#allocation4], 1
    %333 = vsyncpa %s332, 1

</llo_original>
